<compile_context>
chip_gen: v7x
topology: tpu7x:2x2x1
jax: 0.10.0
libtpu: 0.0.40
codegen_flags: <defaults>
</compile_context>

<pallas_src>
import jax
import jax.numpy as jnp
import numpy as np
from jax import lax
from jax.experimental import pallas as pl
from jax.experimental.pallas import tpu as pltpu

LN_EPS = 1e-5  # torch.nn.LayerNorm default


def _round_up(x, m):
    return (x + m - 1) // m * m


def _layer_norm_f32(v, g, b):
    """LayerNorm with f32 math regardless of input dtype (torch-style biased var)."""
    v = v.astype(jnp.float32)
    mu = jnp.mean(v, axis=-1, keepdims=True)
    c = v - mu
    var = jnp.mean(c * c, axis=-1, keepdims=True)
    return c * lax.rsqrt(var + LN_EPS) * g + b


# -----------------------------------------------------------------------------
# Streaming kernel: LayerNorm -> fc_seq (bf16 MXU, f32 acc) -> masked_fill
# for one tile of token rows.
# -----------------------------------------------------------------------------
def _seq_kernel(x_ref, keep_ref, snw_ref, snb_ref, ws_ref, bs_ref, sout_ref):
    y = _layer_norm_f32(x_ref[...], snw_ref[...], snb_ref[...])      # (TM, H) f32
    s = jnp.dot(y.astype(jnp.bfloat16), ws_ref[...],                 # bf16 MXU, f32 acc
                preferred_element_type=jnp.float32) + bs_ref[...]
    keep = keep_ref[...] != 0.0                                      # (TM, 1) bool
    sout_ref[...] = jnp.where(keep, s, 0.0).astype(sout_ref.dtype)


# -----------------------------------------------------------------------------
# Tiny kernel: LayerNorm -> fc_global on the B CLS rows (single grid step).
# -----------------------------------------------------------------------------
def _global_kernel(cls_ref, gnw_ref, gnb_ref, wg_ref, bg_ref, gout_ref):
    y = _layer_norm_f32(cls_ref[...], gnw_ref[...], gnb_ref[...])    # (B, H) f32
    g = jnp.dot(y.astype(jnp.bfloat16), wg_ref[...],
                preferred_element_type=jnp.float32) + bg_ref[...]
    gout_ref[...] = g.astype(gout_ref.dtype)


# -----------------------------------------------------------------------------
# TextEncoder head (everything after backbone.last_hidden_state)
# -----------------------------------------------------------------------------
def text_encoder_head(hidden, input_ids, params, pad_id, cls_id, sep_id,
                      *, row_tile=1024, seq_out_dtype=jnp.bfloat16):
    """hidden: (B, T, H) (bf16 preferred, f32 accepted); input_ids: (B, T) int32.
    Returns (global_emb (B, Dg) f32, seq_emb (B, T, Ds) seq_out_dtype,
             key_mask (B, T) bool)."""
    B, T, H = hidden.shape
    N = B * T

    key_mask = (input_ids == pad_id) | (input_ids == cls_id) | (input_ids == sep_id)

    # Token stream in bf16 (matmul LHS is bf16 anyway; LN upcasts in-kernel).
    x = hidden.reshape(N, H)
    if x.dtype != jnp.bfloat16:
        x = x.astype(jnp.bfloat16)
    cls_emb = hidden[:, 0, :]                                   # (B, H) CLS rows
    keep = jnp.logical_not(key_mask).reshape(N, 1).astype(jnp.float32)

    Dg = params["wg_t"].shape[1]
    Ds = params["ws_t"].shape[1]

    # Weights pre-transposed to (H, D); bf16 for the MXU, biases/LN params f32.
    ws = params["ws_t"].astype(jnp.bfloat16)
    wg = params["wg_t"].astype(jnp.bfloat16)
    bs = params["bs"].reshape(1, Ds).astype(jnp.float32)
    bg = params["bg"].reshape(1, Dg).astype(jnp.float32)
    snw = params["sn_w"].reshape(1, H).astype(jnp.float32)
    snb = params["sn_b"].reshape(1, H).astype(jnp.float32)
    gnw = params["gn_w"].reshape(1, H).astype(jnp.float32)
    gnb = params["gn_b"].reshape(1, H).astype(jnp.float32)

    # Large row tiles amortize per-step overhead; clamp to the (8-aligned)
    # problem size so tiny inputs use a single exact block.
    tm = max(8, min(row_tile, _round_up(N, 8)))
    grid = (pl.cdiv(N, tm),)

    # Double-buffered working-set estimate (streamed blocks + residents), with
    # a generation-aware ceiling (~3/4 of physical VMEM per core).
    est = 2 * (tm * H * 2 + tm * Ds * 2 + tm * 4        # x (bf16), seq out (bf16), keep
               + H * Ds * 2 + Ds * 4 + 2 * H * 4)       # fc_seq weight/bias, LN params
    try:
        vmem_cap = int(pltpu.get_tpu_info().vmem_capacity_bytes)
    except Exception:
        vmem_cap = 64 << 20                             # conservative (v7x per-TC)
    vmem_limit = int(min(max(est + (4 << 20), 32 << 20), (vmem_cap * 3) // 4))

    # ---- sequence path: streaming, row-parallel ----
    seq_out = pl.pallas_call(
        _seq_kernel,
        out_shape=jax.ShapeDtypeStruct((N, Ds), seq_out_dtype),
        grid=grid,
        in_specs=[
            pl.BlockSpec((tm, H), lambda i: (i, 0)),    # token rows (bf16)
            pl.BlockSpec((tm, 1), lambda i: (i, 0)),    # keep mask
            pl.BlockSpec((1, H), lambda i: (0, 0)),     # seq LN gamma
            pl.BlockSpec((1, H), lambda i: (0, 0)),     # seq LN beta
            pl.BlockSpec((H, Ds), lambda i: (0, 0)),    # fc_seq weight (bf16)
            pl.BlockSpec((1, Ds), lambda i: (0, 0)),    # fc_seq bias
        ],
        out_specs=pl.BlockSpec((tm, Ds), lambda i: (i, 0)),
        compiler_params=pltpu.CompilerParams(
            dimension_semantics=("parallel",),
            vmem_limit_bytes=vmem_limit),
    )(x, keep, snw, snb, ws, bs)

    # ---- global path: B CLS rows, single grid step (hoisted out of the
    # streaming kernel to avoid per-step recompute / revisited-output hazard) ----
    global_emb = pl.pallas_call(
        _global_kernel,
        out_shape=jax.ShapeDtypeStruct((B, Dg), jnp.float32),
        grid=(1,),
        in_specs=[
            pl.BlockSpec((B, H), lambda i: (0, 0)),     # CLS rows
            pl.BlockSpec((1, H), lambda i: (0, 0)),     # global LN gamma
            pl.BlockSpec((1, H), lambda i: (0, 0)),     # global LN beta
            pl.BlockSpec((H, Dg), lambda i: (0, 0)),    # fc_global weight (bf16)
            pl.BlockSpec((1, Dg), lambda i: (0, 0)),    # fc_global bias
        ],
        out_specs=pl.BlockSpec((B, Dg), lambda i: (0, 0)),
    )(cls_emb, gnw, gnb, wg, bg)

    seq_emb = seq_out.reshape(B, T, Ds)
    return global_emb, seq_emb, key_mask


# -----------------------------------------------------------------------------
# Pure-JAX reference (f32 semantics of the PyTorch forward)
# -----------------------------------------------------------------------------
def reference_head(hidden, input_ids, params, pad_id, cls_id, sep_id):
    def ln(x, g, b):
        mu = jnp.mean(x, axis=-1, keepdims=True)
        var = jnp.mean((x - mu) ** 2, axis=-1, keepdims=True)
        return (x - mu) / jnp.sqrt(var + LN_EPS) * g + b

    key_mask = (input_ids == pad_id) | (input_ids == cls_id) | (input_ids == sep_id)
    cls_emb = hidden[:, 0, :]
    global_emb = ln(cls_emb, params["gn_w"], params["gn_b"]) @ params["wg_t"] + params["bg"]
    seq_emb = ln(hidden, params["sn_w"], params["sn_b"]) @ params["ws_t"] + params["bs"]
    seq_emb = jnp.where(key_mask[..., None], 0.0, seq_emb)
    return global_emb, seq_emb, key_mask


def xavier_uniform(key, fan_in, fan_out):
    bound = float(np.sqrt(6.0 / (fan_in + fan_out)))
    # stored already transposed: (in, out)
    return jax.random.uniform(key, (fan_in, fan_out), jnp.float32, -bound, bound)


if __name__ == "__main__":
    # Small synthetic shapes consistent with the module's forward:
    #   B sentences, T tokens, H = backbone hidden size,
    #   hidden_dim = global projection dim, seq_dim = per-token projection dim.
    B, T, H = 2, 8, 32
    hidden_dim, seq_dim = 16, 32
    cls_id, pad_id, sep_id = 0, 1, 2

    key = jax.random.PRNGKey(0)
    k_hid, k_wg, k_ws = jax.random.split(key, 3)

    # TODO(synk): tokenizer / Text2PhonemeSequence / frozen XPhoneBERT backbone
    # are external pretrained components with no Pallas equivalent; `hidden`
    # and `input_ids` are synthesized deterministically instead.
    hidden_f32 = jax.random.normal(k_hid, (B, T, H), jnp.float32)
    hidden = hidden_f32.astype(jnp.bfloat16)   # frozen backbone hands us bf16 activations
    input_ids = jnp.array(
        [[cls_id, 5, 6, 7, 8, 9, sep_id, pad_id],
         [cls_id, 10, 11, 12, sep_id, pad_id, pad_id, pad_id]], dtype=jnp.int32)

    # Deterministic parameter init (matches __init__: xavier weights, zero bias,
    # LayerNorm gamma=1 / beta=0).
    params = {
        "gn_w": jnp.ones((H,), jnp.float32),
        "gn_b": jnp.zeros((H,), jnp.float32),
        "sn_w": jnp.ones((H,), jnp.float32),
        "sn_b": jnp.zeros((H,), jnp.float32),
        "wg_t": xavier_uniform(k_wg, H, hidden_dim),
        "bg": jnp.zeros((hidden_dim,), jnp.float32),
        "ws_t": xavier_uniform(k_ws, H, seq_dim),
        "bs": jnp.zeros((seq_dim,), jnp.float32),
    }

    global_emb, seq_emb, key_mask = jax.block_until_ready(
        text_encoder_head(hidden, input_ids, params, pad_id, cls_id, sep_id))

    # Correctness check vs. pure-JAX f32 reference of the PyTorch semantics,
    # computed on the same bf16-rounded activations.  Tolerance accounts for
    # bf16 MXU operands (f32 accumulation) and the bf16 sequence output.
    g_ref, s_ref, m_ref = reference_head(hidden.astype(jnp.float32), input_ids,
                                         params, pad_id, cls_id, sep_id)
    assert global_emb.shape == (B, hidden_dim)
    assert seq_emb.shape == (B, T, seq_dim)
    assert key_mask.shape == (B, T) and key_mask.dtype == jnp.bool_
    np.testing.assert_allclose(np.asarray(global_emb, np.float32),
                               np.asarray(g_ref), rtol=2e-2, atol=2e-2)
    np.testing.assert_allclose(np.asarray(seq_emb.astype(jnp.float32)),
                               np.asarray(s_ref), rtol=2e-2, atol=2e-2)
    np.testing.assert_array_equal(np.asarray(key_mask), np.asarray(m_ref))

    print("KERNEL_OK")
</pallas_src>

<mosaic_0001>
module attributes {stable_mosaic.version = 11 : i64} {
  func.func @_seq_kernel(%arg0: i32, %arg1: memref<16x32xbf16, #tpu.memory_space<vmem>>, %arg2: memref<16x1xf32, #tpu.memory_space<vmem>>, %arg3: memref<1x32xf32, #tpu.memory_space<vmem>>, %arg4: memref<1x32xf32, #tpu.memory_space<vmem>>, %arg5: memref<32x32xbf16, #tpu.memory_space<vmem>>, %arg6: memref<1x32xf32, #tpu.memory_space<vmem>>, %arg7: memref<16x32xbf16, #tpu.memory_space<vmem>>) attributes {dimension_semantics = [#tpu.dimension_semantics<parallel>], iteration_bounds = array<i64: 1>, scalar_prefetch = 0 : i64, scratch_operands = 0 : i64, tpu.core_type = #tpu.core_type<tc>, window_params = [{transform_indices = @transform_0, window_bounds = array<i64: 16, 32>}, {transform_indices = @transform_1, window_bounds = array<i64: 16, 1>}, {pipeline_mode = #tpu.pipeline_mode<synchronous>, transform_indices = @transform_2, window_bounds = array<i64: 1, 32>}, {pipeline_mode = #tpu.pipeline_mode<synchronous>, transform_indices = @transform_3, window_bounds = array<i64: 1, 32>}, {pipeline_mode = #tpu.pipeline_mode<synchronous>, transform_indices = @transform_4, window_bounds = array<i64: 32, 32>}, {pipeline_mode = #tpu.pipeline_mode<synchronous>, transform_indices = @transform_5, window_bounds = array<i64: 1, 32>}, {transform_indices = @transform_6, window_bounds = array<i64: 16, 32>}]} {
    %c0 = arith.constant 0 : index
    %c0_0 = arith.constant 0 : index
    %0 = vector.load %arg1[%c0, %c0_0] : memref<16x32xbf16, #tpu.memory_space<vmem>>, vector<16x32xbf16>
    %c0_1 = arith.constant 0 : index
    %c0_2 = arith.constant 0 : index
    %1 = vector.load %arg3[%c0_1, %c0_2] : memref<1x32xf32, #tpu.memory_space<vmem>>, vector<1x32xf32>
    %c0_3 = arith.constant 0 : index
    %c0_4 = arith.constant 0 : index
    %2 = vector.load %arg4[%c0_3, %c0_4] : memref<1x32xf32, #tpu.memory_space<vmem>>, vector<1x32xf32>
    %3 = arith.extf %0 : vector<16x32xbf16> to vector<16x32xf32>
    %cst = arith.constant dense<0.000000e+00> : vector<16xf32>
    %4 = vector.multi_reduction <add>, %3, %cst [1] : vector<16x32xf32> to vector<16xf32>
    %5 = vector.shape_cast %4 : vector<16xf32> to vector<16x1xf32>
    %cst_5 = arith.constant 3.200000e+01 : f32
    %6 = vector.broadcast %cst_5 : f32 to vector<16x1xf32>
    %7 = arith.divf %5, %6 : vector<16x1xf32>
    %8 = vector.broadcast %7 : vector<16x1xf32> to vector<16x32xf32>
    %9 = arith.subf %3, %8 : vector<16x32xf32>
    %10 = arith.mulf %9, %9 : vector<16x32xf32>
    %cst_6 = arith.constant dense<0.000000e+00> : vector<16xf32>
    %11 = vector.multi_reduction <add>, %10, %cst_6 [1] : vector<16x32xf32> to vector<16xf32>
    %12 = vector.shape_cast %11 : vector<16xf32> to vector<16x1xf32>
    %cst_7 = arith.constant 3.200000e+01 : f32
    %13 = vector.broadcast %cst_7 : f32 to vector<16x1xf32>
    %14 = arith.divf %12, %13 : vector<16x1xf32>
    %cst_8 = arith.constant 9.99999974E-6 : f32
    %15 = vector.broadcast %cst_8 : f32 to vector<16x1xf32>
    %16 = arith.addf %14, %15 : vector<16x1xf32>
    %17 = math.rsqrt %16 : vector<16x1xf32>
    %18 = vector.broadcast %17 : vector<16x1xf32> to vector<16x32xf32>
    %19 = arith.mulf %9, %18 : vector<16x32xf32>
    %20 = vector.broadcast %1 : vector<1x32xf32> to vector<16x32xf32>
    %21 = arith.mulf %19, %20 : vector<16x32xf32>
    %22 = vector.broadcast %2 : vector<1x32xf32> to vector<16x32xf32>
    %23 = arith.addf %21, %22 : vector<16x32xf32>
    %24 = arith.truncf %23 : vector<16x32xf32> to vector<16x32xbf16>
    %c0_9 = arith.constant 0 : index
    %c0_10 = arith.constant 0 : index
    %25 = vector.load %arg5[%c0_9, %c0_10] : memref<32x32xbf16, #tpu.memory_space<vmem>>, vector<32x32xbf16>
    %cst_11 = arith.constant dense<0.000000e+00> : vector<16x32xf32>
    %26 = tpu.matmul %24, %25, %cst_11 {dimension_numbers = #tpu.dot_dimension_numbers<[1], [0], [0], [1], [0, 0, 1, 1], [], []>} : vector<16x32xbf16>, vector<32x32xbf16>, vector<16x32xf32> -> vector<16x32xf32>
    %c0_12 = arith.constant 0 : index
    %c0_13 = arith.constant 0 : index
    %27 = vector.load %arg6[%c0_12, %c0_13] : memref<1x32xf32, #tpu.memory_space<vmem>>, vector<1x32xf32>
    %28 = vector.broadcast %27 : vector<1x32xf32> to vector<16x32xf32>
    %29 = arith.addf %26, %28 : vector<16x32xf32>
    %c0_14 = arith.constant 0 : index
    %c0_15 = arith.constant 0 : index
    %30 = vector.load %arg2[%c0_14, %c0_15] : memref<16x1xf32, #tpu.memory_space<vmem>>, vector<16x1xf32>
    %cst_16 = arith.constant 0.000000e+00 : f32
    %31 = vector.broadcast %cst_16 : f32 to vector<16x1xf32>
    %32 = arith.cmpf one, %30, %31 : vector<16x1xf32>
    %cst_17 = arith.constant 0.000000e+00 : f32
    %33 = vector.shape_cast %32 : vector<16x1xi1> to vector<16x1xi1>
    %34 = vector.broadcast %33 : vector<16x1xi1> to vector<16x32xi1>
    %35 = vector.broadcast %cst_17 : f32 to vector<16x32xf32>
    %36 = arith.select %34, %29, %35 : vector<16x32xi1>, vector<16x32xf32>
    %37 = arith.truncf %36 : vector<16x32xf32> to vector<16x32xbf16>
    %c0_18 = arith.constant 0 : index
    %c0_19 = arith.constant 0 : index
    %38 = vector.load %arg7[%c0_18, %c0_19] : memref<16x32xbf16, #tpu.memory_space<vmem>>, vector<16x32xbf16>
    tpu.vector_store %arg7[%c0_18, %c0_19], %37 {strides = array<i32>} : memref<16x32xbf16, #tpu.memory_space<vmem>>, vector<16x32xbf16>,
    return
  }
  func.func @transform_0(%arg0: i32) -> (i32, i32) {
    %c0_i32 = arith.constant 0 : i32
    %c0_i32_0 = arith.constant 0 : i32
    return %arg0, %c0_i32 : i32, i32
  }
  func.func @transform_1(%arg0: i32) -> (i32, i32) {
    %c0_i32 = arith.constant 0 : i32
    %c0_i32_0 = arith.constant 0 : i32
    return %arg0, %c0_i32 : i32, i32
  }
  func.func @transform_2(%arg0: i32) -> (i32, i32) {
    %c0_i32 = arith.constant 0 : i32
    %c0_i32_0 = arith.constant 0 : i32
    %c0_i32_1 = arith.constant 0 : i32
    return %c0_i32, %c0_i32_0 : i32, i32
  }
  func.func @transform_3(%arg0: i32) -> (i32, i32) {
    %c0_i32 = arith.constant 0 : i32
    %c0_i32_0 = arith.constant 0 : i32
    %c0_i32_1 = arith.constant 0 : i32
    return %c0_i32, %c0_i32_0 : i32, i32
  }
  func.func @transform_4(%arg0: i32) -> (i32, i32) {
    %c0_i32 = arith.constant 0 : i32
    %c0_i32_0 = arith.constant 0 : i32
    %c0_i32_1 = arith.constant 0 : i32
    return %c0_i32, %c0_i32_0 : i32, i32
  }
  func.func @transform_5(%arg0: i32) -> (i32, i32) {
    %c0_i32 = arith.constant 0 : i32
    %c0_i32_0 = arith.constant 0 : i32
    %c0_i32_1 = arith.constant 0 : i32
    return %c0_i32, %c0_i32_0 : i32, i32
  }
  func.func @transform_6(%arg0: i32) -> (i32, i32) {
    %c0_i32 = arith.constant 0 : i32
    %c0_i32_0 = arith.constant 0 : i32
    return %arg0, %c0_i32 : i32, i32
  }
}

</mosaic_0001>

<llo_original>
// kernel: tpu_custom_call.1
$region0: #{tpu_custom_call.1}
  #allocation0 [shape = 'u32[]', space=smem, size = 0x4, offset = 0x4, fixed_abs, tag = 'smem constant byte address 0x4 - core index']
  #allocation1 [shape = 'u32[144,128]{1,0:T(1,128)}', space=vmem, size = 0x12000, scoped, tag = 'internal scratch']
  %s0 = inlined_call_operand.vmem [shape: bf16[16,32], index: 0, kind: input, shape index: {}]
  %s1 = inlined_call_operand.vmem [shape: f32[16,1], index: 1, kind: input, shape index: {}]
  %s2 = inlined_call_operand.vmem [shape: f32[1,32], index: 2, kind: input, shape index: {}]
  %s3 = inlined_call_operand.vmem [shape: f32[1,32], index: 3, kind: input, shape index: {}]
  %s4 = inlined_call_operand.vmem [shape: bf16[32,32], index: 4, kind: input, shape index: {}]
  %s5 = inlined_call_operand.vmem [shape: f32[1,32], index: 5, kind: input, shape index: {}]
  %s6 = inlined_call_operand.hbm [shape: bf16[16,32], index: 6, kind: output, shape index: {}]
  %s7 = sld [smem:[#allocation0]]
  $region34: #{tpu_custom_call.1} parent=0
    _
  %s9 = ssub.s32 1, %s7
  %s10 = scalar_select 0, %s9, %s7
  $region1: #{tpu_custom_call.1} parent=0
    #allocation2 [shape = 'u8[4096]{0}', space=vmem, size = 0x1000, scoped, tag = 'output window, operand 0, single buffered']
    #allocation3 [shape = 's32[1]{0}', space=sflag, size = 0x4, scoped, tag = 'scoped memory for tpu_custom_call.1']
    %11 = vsyncpa [#allocation3], 0
    // Predicated region
    $region2: #{tpu_custom_call.1} parent=1 // pred_check
      _
    $region3: #{tpu_custom_call.1} parent=1 // pred_check_branch
      %13 = sbr.rel (0) target = $region5
    $region4: #{tpu_custom_call.1} parent=1 // pred_region
      _
    $region5: #{tpu_custom_call.1} parent=1 // pred_fallthru
      _
    // Predicated region
    $region6: #{tpu_custom_call.1} parent=1 // pred_check
      _
    $region7: #{tpu_custom_call.1} parent=1 // pred_check_branch
      %15 = sbr.rel (0) target = $region9
    $region8: #{tpu_custom_call.1} parent=1 // pred_region
      _
    $region9: #{tpu_custom_call.1} parent=1 // pred_fallthru
      _
    // Predicated region
    $region10: #{tpu_custom_call.1} parent=1 // pred_check
      _
    $region11: #{tpu_custom_call.1} parent=1 // pred_check_branch
      %17 = sbr.rel (0) target = $region13
    $region12: #{tpu_custom_call.1} parent=1 // pred_region
      _
    $region13: #{tpu_custom_call.1} parent=1 // pred_fallthru
      _
    // Predicated region
    $region14: #{tpu_custom_call.1} parent=1 // pred_check
      _
    $region15: #{tpu_custom_call.1} parent=1 // pred_check_branch
      %19 = sbr.rel (0) target = $region17
    $region16: #{tpu_custom_call.1} parent=1 // pred_region
      _
    $region17: #{tpu_custom_call.1} parent=1 // pred_fallthru
      _
    // Predicated region
    $region18: #{tpu_custom_call.1} parent=1 // pred_check
      _
    $region19: #{tpu_custom_call.1} parent=1 // pred_check_branch
      %21 = sbr.rel (0) target = $region21
    $region20: #{tpu_custom_call.1} parent=1 // pred_region
      _
    $region21: #{tpu_custom_call.1} parent=1 // pred_fallthru
      _
    // Predicated region
    $region22: #{tpu_custom_call.1} parent=1 // pred_check
      _
    $region23: #{tpu_custom_call.1} parent=1 // pred_check_branch
      %23 = sbr.rel (0) target = $region25
    $region24: #{tpu_custom_call.1} parent=1 // pred_region
      _
    $region25: #{tpu_custom_call.1} parent=1 // pred_fallthru
      _
    %v25 = vld [vmem:[%s0] sm:$0xf]
    %v26 = vld [vmem:[%s0 + $0x4] sm:$0xf]
    %v27 = vld [vmem:[%s2] sm:$0x1]
    %v28 = vld [vmem:[%s3] sm:$0x1]
    %v29 = vunpack.c.l.bf16 %v25
    %v30 = vunpack.c.l.bf16 %v26
    %vm31 = vcmask 261120
    %v32 = vsel %vm31, %v29, 0.0
    %33 = vadd.xlane.f32.xlu0 %v32
    %v34 = vpop.xlane.xlu0 %33
    %v35 = vsel %vm31, %v30, 0.0
    %36 = vadd.xlane.f32.xlu0 %v35
    %v37 = vpop.xlane.xlu0 %36
    %v38 = vrcp.pop 32.0
    %v39 = vmul.f32 %v34, %v38
    %v40 = vmul.f32 %v37, %v38
    %v41 = vsub.f32 %v29, %v39
    %v42 = vsub.f32 %v30, %v40
    %v43 = vmul.f32 %v41, %v41
    %v44 = vmul.f32 %v42, %v42
    %v45 = vsel %vm31, %v43, 0.0
    %46 = vadd.xlane.f32.xlu0 %v45
    %v47 = vpop.xlane.xlu0 %46
    %v48 = vsel %vm31, %v44, 0.0
    %49 = vadd.xlane.f32.xlu0 %v48
    %v50 = vpop.xlane.xlu0 %49
    %v51 = vmul.f32 %v47, %v38
    %v52 = vmul.f32 %v50, %v38
    %v53 = vadd.f32 %v51, 1e-05
    %v54 = vadd.f32 %v52, 1e-05
    %v55 = vrsqrt.pop %v53
    %v56 = vrsqrt.pop %v54
    %v57 = vmul.f32 %v41, %v55
    %v58 = vmul.f32 %v42, %v56
    %v60 = vlaneseq
    %v61 = vshrl.u32 %v60, 7
    %v62 = vsub.s32 0, %v61
    %v63 = vrot.slane %v27, %v62
    %v65 = vmul.f32 %v57, %v63
    %v66 = vmul.f32 %v58, %v63
    %v68 = vlaneseq
    %v69 = vshrl.u32 %v68, 7
    %v70 = vsub.s32 0, %v69
    %v71 = vrot.slane %v28, %v70
    %v73 = vadd.f32 %v65, %v71
    %v74 = vadd.f32 %v66, %v71
    %v75 = vpack.c.bf16 %v74, %v73
    %v76 = vld [vmem:[%s4] sm:$0xf]
    %v77 = vld [vmem:[%s4 + $0x4] sm:$0xf]
    %v78 = vld [vmem:[%s4 + $0x8] sm:$0xf]
    %v79 = vld [vmem:[%s4 + $0xc] sm:$0xf]
    %v80 = vld [vmem:[%s5] sm:$0x1]
    %v82 = vlaneseq
    %v83 = vshrl.u32 %v82, 7
    %v84 = vsub.s32 0, %v83
    %v85 = vrot.slane %v80, %v84
    %v91 = vunpack.c.l.b16 %v76
    %v92 = vunpack.c.l.b16 %v77
    %v93 = vunpack.c.l.b16 %v78
    %v94 = vunpack.c.l.b16 %v79
    %v95 = vpack.c.b16 %v92, %v91
    %v96 = vpack.c.b16 %v94, %v93
    %v100 = vsel %vm31, %v75, 0
    %102 = vmatprep.subr.bf16.mxu0 0
    %103 = vmatpush1.bf16.msra.mxu0 %v95
    %104 = vmatprep.subr.bf16.mxu0 0
    %105 = vmatpush1.bf16.msra.mxu0 %v96
    %106 = vmatprep.subr.bf16.mxu0 0
    %107 = vmatpush1.bf16.msra.mxu0 0
    %108 = vmatprep.subr.bf16.mxu0 0
    %109 = vmatpush1.bf16.msra.mxu0 0
    %110 = vmatprep.subr.bf16.mxu0 0
    %111 = vmatpush1.bf16.msra.mxu0 0
    %112 = vmatprep.subr.bf16.mxu0 0
    %113 = vmatpush1.bf16.msra.mxu0 0
    %114 = vmatprep.subr.bf16.mxu0 0
    %115 = vmatpush1.bf16.msra.mxu0 0
    %116 = vmatprep.subr.bf16.mxu0 0
    %117 = vmatpush1.bf16.msra.mxu0 0
    %118 = vmatprep.subr.bf16.mxu0 0
    %119 = vmatpush1.bf16.msra.mxu0 0
    %120 = vmatprep.subr.bf16.mxu0 0
    %121 = vmatpush1.bf16.msra.mxu0 0
    %122 = vmatprep.subr.bf16.mxu0 0
    %123 = vmatpush1.bf16.msra.mxu0 0
    %124 = vmatprep.subr.bf16.mxu0 0
    %125 = vmatpush1.bf16.msra.mxu0 0
    %126 = vmatprep.subr.bf16.mxu0 0
    %127 = vmatpush1.bf16.msra.mxu0 0
    %128 = vmatprep.subr.bf16.mxu0 0
    %129 = vmatpush1.bf16.msra.mxu0 0
    %130 = vmatprep.subr.bf16.mxu0 0
    %131 = vmatpush1.bf16.msra.mxu0 0
    %132 = vmatprep.subr.bf16.mxu0 0
    %133 = vmatpush1.bf16.msra.mxu0 0
    %134 = vmatprep.mubr.bf16.mxu0 0
    %135 = vmatmul.mubr.bf16.gmra.mrb[0].mxu0 %v100
    %v136 = vpop.f32.mrb[0].mxu0
    %v137 = vadd.f32 %v85, %v136
    %v138 = vpop.f32.mrb[0].mxu0
    %v139 = vpop.f32.mrb[0].mxu0
    %v140 = vadd.f32 %v85, %v139
    %v141 = vpop.f32.mrb[0].mxu0
    %142 = vdwg.mxu0
    %v143 = vld [vmem:[%s1] sm:$0xff]
    %v144 = vld [vmem:[%s1 + $0x8] sm:$0xff]
    %vm145 = vcmp.ne.f32.partialorder %v143, 0.0
    %vm146 = vcmp.ne.f32.partialorder %v144, 0.0
    %v147 = vsel %vm145, 1, 0
    %v148 = vsel %vm146, 1, 0
    %149 = vset.pattern.permute.xlu0 0
    %150 = vperm.xlu0 %149, %v147
    %v151 = vpop.permute.xlu0 %150
    %152 = vset.pattern.permute.xlu0 0
    %153 = vperm.xlu0 %152, %v148
    %v154 = vpop.permute.xlu0 %153
    %vm155 = vcmp.eq.s32.totalorder %v151, 1
    %vm156 = vcmp.eq.s32.totalorder %v154, 1
    %v157 = vsel %vm155, %v137, 0.0
    %v158 = vsel %vm156, %v140, 0.0
    %v159 = vpack.c.bf16 %v158, %v157
    %v161 = vunpack.c.l.b16 %v159
    %v162 = vunpack.c.h.b16 %v159
    %v163 = vpack.c.b16 %v161, %v161
    %v164 = vpack.c.b16 %v162, %v162
    %vm167 = vcmask 257024
    %168 = vst.msk [vmem:[#allocation2] sm:$0xf] %vm167, %v163
    %169 = vst.msk [vmem:[#allocation2 + $0x4] sm:$0xf] %vm167, %v164
    // Predicated region
    $region26: #{tpu_custom_call.1} parent=1 // pred_check
      _
    $region27: #{tpu_custom_call.1} parent=1 // pred_check_branch
      %171 = sbr.rel (0) target = $region29
    $region28: #{tpu_custom_call.1} parent=1 // pred_region
      %s173 = ssub.s32 128, 128
      %174 = vsyncadd [#allocation3], %s173
      %s175 = sshll.u32 [#allocation2], 4
      %s176 = int_to_ptr.vmem [resolvable:$true] %s175
      %181 = dma.vmem_to_hbm [thread:$0]  %s176, 128, %s6, [#allocation3], 64, 64, 4
    $region29: #{tpu_custom_call.1} parent=1 // pred_fallthru
      _
    // Predicated region
    $region30: #{tpu_custom_call.1} parent=1 // pred_check
      _
    $region31: #{tpu_custom_call.1} parent=1 // pred_check_branch
      %183 = sbr.rel (0) target = $region33
    $region32: #{tpu_custom_call.1} parent=1 // pred_region
      %184 = dma.done [#allocation3], 128
    $region33: #{tpu_custom_call.1} parent=1 // pred_fallthru
      _
    %185 = vsyncpa [#allocation3], 1

</llo_original>
